<compile_context>
chip_gen: v7x
topology: tpu7x:2x2x1
jax: 0.10.0
libtpu: 0.0.40
codegen_flags: <defaults>
</compile_context>

<pallas_src>
import jax
import jax.numpy as jnp
from jax.experimental import pallas as pl
from jax.experimental.pallas import tpu as pltpu


def tarnet_kernel(feat_ref, treat_ref, w_ref, out_ref):
    # Static sizes derived from ref shapes (no closures needed).
    F = feat_ref.shape[1]
    H2 = w_ref.shape[1]          # 2H (both heads packed along lanes)
    H = H2 // 2

    # ---- Row-0-only network evaluation (matches torch pred_0[0] / pred_1[0]) ----
    feat0 = feat_ref[0:1, :]                                         # (1, F)

    # Static views into the packed weight slab (one DMA for all params).
    wb = w_ref[0:F, 0:H]                                             # (F, H)
    wh1 = w_ref[F:F + H, :]                                          # (H, 2H) = [w01 | w11]
    bb = w_ref[F + H:F + H + 1, 0:H]                                 # (1, H)
    bh1 = w_ref[F + H + 1:F + H + 2, :]                              # (1, 2H)
    w2 = w_ref[F + H + 2:F + H + 3, :]                               # (1, 2H) = [w02^T | w12^T]
    b2 = w_ref[F + H + 3:F + H + 4, 0:2]                             # (1, 2)  = [b02, b12]

    # Shared body: Linear(F, H) + ReLU (1-row MXU matvec).
    body0 = jnp.dot(feat0, wb, preferred_element_type=jnp.float32) + bb
    body0 = jnp.maximum(body0, 0.0)                                  # (1, H)

    # Fused heads, hidden layer: one Linear(H, 2H) + ReLU serves both heads.
    h = jnp.dot(body0, wh1, preferred_element_type=jnp.float32) + bh1
    h = jnp.maximum(h, 0.0)                                          # (1, 2H)

    # Final (H, 1) head layers on the VPU/XLU: multiply + lane reduce (no N=1 MXU matmul).
    prod = h * w2                                                    # (1, 2H)
    p0 = jnp.sum(prod[:, :H], axis=-1, keepdims=True) + b2[:, 0:1]   # (1, 1)
    p1 = jnp.sum(prod[:, H:], axis=-1, keepdims=True) + b2[:, 1:2]   # (1, 1)

    # ---- Lane-dense blend: out[0, i] = p0 + (p1 - p0) * t[i] ----
    out_ref[...] = p0 + (p1 - p0) * treat_ref[...]                   # (1, B)


def pack_params(params):
    """One-time packing of all TARNet params into a single (F+H+4, 2H) f32 slab.

    Row layout (width = 2H):
      [0, F)      : wb   (F, H)   in cols [0, H)
      [F, F+H)    : [w01 | w11]   (H, 2H)
      row F+H     : bb            in cols [0, H)
      row F+H+1   : [b01 | b11]   (1, 2H)
      row F+H+2   : [w02^T|w12^T] (1, 2H)
      row F+H+3   : [b02, b12]    in cols [0, 2)
    """
    (wb, bb, w01, b01, w02, b02, w11, b11, w12, b12) = params
    F, H = wb.shape
    W = jnp.zeros((F + H + 4, 2 * H), jnp.float32)
    W = W.at[0:F, 0:H].set(wb)
    W = W.at[F:F + H, 0:H].set(w01)
    W = W.at[F:F + H, H:2 * H].set(w11)
    W = W.at[F + H, 0:H].set(bb[0])
    W = W.at[F + H + 1, 0:H].set(b01[0])
    W = W.at[F + H + 1, H:2 * H].set(b11[0])
    W = W.at[F + H + 2, 0:H].set(w02[:, 0])
    W = W.at[F + H + 2, H:2 * H].set(w12[:, 0])
    W = W.at[F + H + 3, 0].set(b02[0, 0])
    W = W.at[F + H + 3, 1].set(b12[0, 0])
    return W


@jax.jit
def tarnet_forward(features, treatment, packed_w):
    """features: (B, F) f32; treatment: (B, 1) f32; packed_w: pack_params() output."""
    B = features.shape[0]
    # Lane-dense treatment/output layout; contiguous reshapes are free under jit.
    t_lane = treatment.reshape(1, B)

    vmem = pl.BlockSpec(memory_space=pltpu.MemorySpace.VMEM)
    out = pl.pallas_call(
        tarnet_kernel,
        out_shape=jax.ShapeDtypeStruct((1, B), jnp.float32),
        in_specs=[vmem, vmem, vmem],
        out_specs=vmem,
    )(features, t_lane, packed_w)
    return out.reshape(B, 1)


def init_linear(key, in_features, out_features):
    """Deterministic init mimicking torch.nn.Linear (uniform(-1/sqrt(fan_in), +))."""
    kw, kb = jax.random.split(key)
    bound = 1.0 / jnp.sqrt(jnp.float32(in_features))
    # stored as (in, out) == torch weight.T
    w = jax.random.uniform(kw, (in_features, out_features), jnp.float32, -bound, bound)
    b = jax.random.uniform(kb, (1, out_features), jnp.float32, -bound, bound)
    return w, b


def tarnet_reference(features, treatment, params):
    """Pure-JAX reference with the unfused per-layer math (torch semantics)."""
    (wb, bb, w01, b01, w02, b02, w11, b11, w12, b12) = params
    body = jnp.maximum(features @ wb + bb, 0.0)
    p0 = jnp.maximum(body @ w01 + b01, 0.0) @ w02 + b02
    p1 = jnp.maximum(body @ w11 + b11, 0.0) @ w12 + b12
    # Torch source uses pred_0[0] / pred_1[0]: first row only, broadcast over batch.
    return p0[0:1, :] * (1.0 - treatment) + p1[0:1, :] * treatment


if __name__ == "__main__":
    B, F, H = 8, 16, 32

    key = jax.random.PRNGKey(0)
    k_feat, k_treat, k_b, k_h01, k_h02, k_h11, k_h12 = jax.random.split(key, 7)

    features = jax.random.normal(k_feat, (B, F), jnp.float32)
    treatment = jax.random.bernoulli(k_treat, 0.5, (B, 1)).astype(jnp.float32)

    wb, bb = init_linear(k_b, F, H)
    w01, b01 = init_linear(k_h01, H, H)
    w02, b02 = init_linear(k_h02, H, 1)
    w11, b11 = init_linear(k_h11, H, H)
    w12, b12 = init_linear(k_h12, H, 1)
    params = (wb, bb, w01, b01, w02, b02, w11, b11, w12, b12)

    # One-time packing (outside the per-call path).
    packed_w = jax.block_until_ready(pack_params(params))

    pred = tarnet_forward(features, treatment, packed_w)
    pred = jax.block_until_ready(pred)

    ref = tarnet_reference(features, treatment, params)
    assert pred.shape == (B, 1)
    assert jnp.allclose(pred, ref, atol=1e-5, rtol=1e-5), (pred, ref)

    print("KERNEL_OK")
</pallas_src>

<mosaic_0001>
module attributes {stable_mosaic.version = 11 : i64} {
  func.func @tarnet_kernel(%arg0: memref<8x16xf32, #tpu.memory_space<vmem>>, %arg1: memref<1x8xf32, #tpu.memory_space<vmem>>, %arg2: memref<52x64xf32, #tpu.memory_space<vmem>>, %arg3: memref<1x8xf32, #tpu.memory_space<vmem>>) attributes {dimension_semantics = [], scalar_prefetch = 0 : i64, scratch_operands = 0 : i64, tpu.core_type = #tpu.core_type<tc>} {
    %c0 = arith.constant 0 : index
    %c0_0 = arith.constant 0 : index
    %0 = vector.load %arg0[%c0, %c0_0] : memref<8x16xf32, #tpu.memory_space<vmem>>, vector<1x16xf32>
    %c0_1 = arith.constant 0 : index
    %c0_2 = arith.constant 0 : index
    %1 = vector.load %arg2[%c0_1, %c0_2] : memref<52x64xf32, #tpu.memory_space<vmem>>, vector<16x32xf32>
    %c16 = arith.constant 16 : index
    %c0_3 = arith.constant 0 : index
    %2 = vector.load %arg2[%c16, %c0_3] : memref<52x64xf32, #tpu.memory_space<vmem>>, vector<32x64xf32>
    %c48 = arith.constant 48 : index
    %c0_4 = arith.constant 0 : index
    %3 = vector.load %arg2[%c48, %c0_4] : memref<52x64xf32, #tpu.memory_space<vmem>>, vector<1x32xf32>
    %c49 = arith.constant 49 : index
    %c0_5 = arith.constant 0 : index
    %4 = vector.load %arg2[%c49, %c0_5] : memref<52x64xf32, #tpu.memory_space<vmem>>, vector<1x64xf32>
    %c50 = arith.constant 50 : index
    %c0_6 = arith.constant 0 : index
    %5 = vector.load %arg2[%c50, %c0_6] : memref<52x64xf32, #tpu.memory_space<vmem>>, vector<1x64xf32>
    %c51 = arith.constant 51 : index
    %c0_7 = arith.constant 0 : index
    %6 = vector.load %arg2[%c51, %c0_7] : memref<52x64xf32, #tpu.memory_space<vmem>>, vector<1x2xf32>
    %cst = arith.constant dense<0.000000e+00> : vector<1x32xf32>
    %7 = tpu.matmul %0, %1, %cst {dimension_numbers = #tpu.dot_dimension_numbers<[1], [0], [0], [1], [0, 0, 1, 1], [], []>} : vector<1x16xf32>, vector<16x32xf32>, vector<1x32xf32> -> vector<1x32xf32>
    %8 = arith.addf %7, %3 : vector<1x32xf32>
    %cst_8 = arith.constant 0.000000e+00 : f32
    %9 = vector.broadcast %cst_8 : f32 to vector<1x32xf32>
    %10 = arith.maximumf %8, %9 : vector<1x32xf32>
    %cst_9 = arith.constant dense<0.000000e+00> : vector<1x64xf32>
    %11 = tpu.matmul %10, %2, %cst_9 {dimension_numbers = #tpu.dot_dimension_numbers<[1], [0], [0], [1], [0, 0, 1, 1], [], []>} : vector<1x32xf32>, vector<32x64xf32>, vector<1x64xf32> -> vector<1x64xf32>
    %12 = arith.addf %11, %4 : vector<1x64xf32>
    %cst_10 = arith.constant 0.000000e+00 : f32
    %13 = vector.broadcast %cst_10 : f32 to vector<1x64xf32>
    %14 = arith.maximumf %12, %13 : vector<1x64xf32>
    %15 = arith.mulf %14, %5 : vector<1x64xf32>
    %16 = vector.extract_strided_slice %15 {offsets = [0, 0], sizes = [1, 32], strides = [1, 1]} : vector<1x64xf32> to vector<1x32xf32>
    %cst_11 = arith.constant dense<0.000000e+00> : vector<1xf32>
    %17 = vector.multi_reduction <add>, %16, %cst_11 [1] : vector<1x32xf32> to vector<1xf32>
    %18 = vector.shape_cast %17 : vector<1xf32> to vector<1x1xf32>
    %19 = vector.extract_strided_slice %6 {offsets = [0, 0], sizes = [1, 1], strides = [1, 1]} : vector<1x2xf32> to vector<1x1xf32>
    %20 = arith.addf %18, %19 : vector<1x1xf32>
    %21 = vector.extract_strided_slice %15 {offsets = [0, 32], sizes = [1, 32], strides = [1, 1]} : vector<1x64xf32> to vector<1x32xf32>
    %cst_12 = arith.constant dense<0.000000e+00> : vector<1xf32>
    %22 = vector.multi_reduction <add>, %21, %cst_12 [1] : vector<1x32xf32> to vector<1xf32>
    %23 = vector.shape_cast %22 : vector<1xf32> to vector<1x1xf32>
    %24 = vector.extract_strided_slice %6 {offsets = [0, 1], sizes = [1, 1], strides = [1, 1]} : vector<1x2xf32> to vector<1x1xf32>
    %25 = arith.addf %23, %24 : vector<1x1xf32>
    %26 = arith.subf %25, %20 : vector<1x1xf32>
    %c0_13 = arith.constant 0 : index
    %c0_14 = arith.constant 0 : index
    %27 = vector.load %arg1[%c0_13, %c0_14] : memref<1x8xf32, #tpu.memory_space<vmem>>, vector<1x8xf32>
    %28 = vector.broadcast %26 : vector<1x1xf32> to vector<1x8xf32>
    %29 = arith.mulf %28, %27 : vector<1x8xf32>
    %30 = vector.broadcast %20 : vector<1x1xf32> to vector<1x8xf32>
    %31 = arith.addf %30, %29 : vector<1x8xf32>
    %c0_15 = arith.constant 0 : index
    %c0_16 = arith.constant 0 : index
    %32 = vector.load %arg3[%c0_15, %c0_16] : memref<1x8xf32, #tpu.memory_space<vmem>>, vector<1x8xf32>
    tpu.vector_store %arg3[%c0_15, %c0_16], %31 {strides = array<i32>} : memref<1x8xf32, #tpu.memory_space<vmem>>, vector<1x8xf32>,
    return
  }
}

</mosaic_0001>

<llo_original>
// kernel: tarnet_forward.1
$region0: #{tarnet_forward.1}
  #allocation0 [shape = 'u32[]', space=smem, size = 0x4, offset = 0x4, fixed_abs, tag = 'smem constant byte address 0x4 - core index']
  #allocation1 [shape = 'u32[144,128]{1,0:T(1,128)}', space=vmem, size = 0x12000, scoped, tag = 'internal scratch']
  %s0 = inlined_call_operand.hbm [shape: f32[8,16], index: 0, kind: input, shape index: {}]
  %s1 = inlined_call_operand.vmem [shape: f32[1,8], index: 1, kind: input, shape index: {}]
  %s2 = inlined_call_operand.hbm [shape: f32[52,64], index: 2, kind: input, shape index: {}]
  %s3 = inlined_call_operand.hbm [shape: f32[1,8], index: 3, kind: output, shape index: {}]
  %s4 = sld [smem:[#allocation0]]
  $region30: #{tarnet_forward.1} parent=0
    _
  %s6 = ssub.s32 1, %s4
  %s7 = scalar_select 0, %s6, %s4
  $region1: #{tarnet_forward.1} parent=0
    #allocation2 [shape = 'u8[4096]{0}', space=vmem, size = 0x1000, scoped, tag = 'input window, operand 0, single buffered']
    #allocation3 [shape = 's32[1]{0}', space=sflag, size = 0x4, scoped, tag = 'scoped memory for tarnet_forward.1']
    #allocation4 [shape = 's32[1]{0}', space=sflag, size = 0x4, scoped, tag = 'scoped memory for tarnet_forward.1']
    #allocation5 [shape = 'u8[28672]{0}', space=vmem, size = 0x7000, scoped, tag = 'input window, operand 2, single buffered']
    #allocation6 [shape = 's32[1]{0}', space=sflag, size = 0x4, scoped, tag = 'scoped memory for tarnet_forward.1']
    #allocation7 [shape = 'u8[512]{0}', space=vmem, size = 0x400, scoped, tag = 'output window, operand 0, single buffered']
    %8 = vsyncpa [#allocation3], 0
    %9 = vsyncpa [#allocation6], 0
    %10 = vsyncpa [#allocation4], 0
    // Predicated region
    $region2: #{tarnet_forward.1} parent=1 // pred_check
      _
    $region3: #{tarnet_forward.1} parent=1 // pred_check_branch
      %12 = sbr.rel (0) target = $region5
    $region4: #{tarnet_forward.1} parent=1 // pred_region
      %s14 = ssub.s32 128, 128
      %15 = vsyncadd [#allocation3], %s14
      %s17 = sshll.u32 [#allocation2], 4
      %s18 = int_to_ptr.vmem [resolvable:$true] %s17
      %20 = dma.hbm_to_vmem [thread:$0]  %s0, 128, %s18, [#allocation3]
    $region5: #{tarnet_forward.1} parent=1 // pred_fallthru
      _
    // Predicated region
    $region6: #{tarnet_forward.1} parent=1 // pred_check
      _
    $region7: #{tarnet_forward.1} parent=1 // pred_check_branch
      %22 = sbr.rel (0) target = $region9
    $region8: #{tarnet_forward.1} parent=1 // pred_region
      _
    $region9: #{tarnet_forward.1} parent=1 // pred_fallthru
      _
    // Predicated region
    $region10: #{tarnet_forward.1} parent=1 // pred_check
      _
    $region11: #{tarnet_forward.1} parent=1 // pred_check_branch
      %24 = sbr.rel (0) target = $region13
    $region12: #{tarnet_forward.1} parent=1 // pred_region
      %s26 = ssub.s32 896, 896
      %27 = vsyncadd [#allocation6], %s26
      %s28 = sshll.u32 [#allocation5], 4
      %s29 = int_to_ptr.vmem [resolvable:$true] %s28
      %34 = dma.hbm_to_vmem [thread:$0]  %s2, 896, %s29, [#allocation6], 128, 128, 8
    $region13: #{tarnet_forward.1} parent=1 // pred_fallthru
      _
    // Predicated region
    $region14: #{tarnet_forward.1} parent=1 // pred_check
      _
    $region15: #{tarnet_forward.1} parent=1 // pred_check_branch
      %36 = sbr.rel (0) target = $region17
    $region16: #{tarnet_forward.1} parent=1 // pred_region
      %37 = dma.done [#allocation3], 128
    $region17: #{tarnet_forward.1} parent=1 // pred_fallthru
      _
    // Predicated region
    $region18: #{tarnet_forward.1} parent=1 // pred_check
      _
    $region19: #{tarnet_forward.1} parent=1 // pred_check_branch
      %39 = sbr.rel (0) target = $region21
    $region20: #{tarnet_forward.1} parent=1 // pred_region
      %40 = dma.done [#allocation6], 896
    $region21: #{tarnet_forward.1} parent=1 // pred_fallthru
      _
    %v41 = vld [vmem:[#allocation2] sm:$0x1]
    %v42 = vld [vmem:[#allocation5] sm:$0xff]
    %v43 = vld [vmem:[#allocation5 + $0x8] sm:$0xff]
    %v44 = vld [vmem:[#allocation5 + $0x10] sm:$0xff]
    %v45 = vld [vmem:[#allocation5 + $0x18] sm:$0xff]
    %v46 = vld [vmem:[#allocation5 + $0x20] sm:$0xff]
    %v47 = vld [vmem:[#allocation5 + $0x28] sm:$0xff]
    %v48 = vld [vmem:[#allocation5 + $0x30] sm:$0x1]
    %v49 = vld [vmem:[#allocation5 + $0x31] sm:$0x1]
    %v50 = vld [vmem:[#allocation5 + $0x32] sm:$0x1]
    %v51 = vld [vmem:[#allocation5 + $0x33] sm:$0x1]
    %vm52 = vcmask 130048
    %v54 = vsel %vm52, %v41, 0
    %56 = vmatprep.subr.mxu0 0.0
    %57 = vmatpush1.msra.mxu0 %v42
    %58 = vmatprep.subr.mxu0 0.0
    %59 = vmatpush1.msra.mxu0 %v43
    %60 = vmatprep.subr.mxu0 0.0
    %61 = vmatpush1.msra.mxu0 0.0
    %62 = vmatprep.subr.mxu0 0.0
    %63 = vmatpush1.msra.mxu0 0.0
    %64 = vmatprep.subr.mxu0 0.0
    %65 = vmatpush1.msra.mxu0 0.0
    %66 = vmatprep.subr.mxu0 0.0
    %67 = vmatpush1.msra.mxu0 0.0
    %68 = vmatprep.subr.mxu0 0.0
    %69 = vmatpush1.msra.mxu0 0.0
    %70 = vmatprep.subr.mxu0 0.0
    %71 = vmatpush1.msra.mxu0 0.0
    %72 = vmatprep.subr.mxu0 0.0
    %73 = vmatpush1.msra.mxu0 0.0
    %74 = vmatprep.subr.mxu0 0.0
    %75 = vmatpush1.msra.mxu0 0.0
    %76 = vmatprep.subr.mxu0 0.0
    %77 = vmatpush1.msra.mxu0 0.0
    %78 = vmatprep.subr.mxu0 0.0
    %79 = vmatpush1.msra.mxu0 0.0
    %80 = vmatprep.subr.mxu0 0.0
    %81 = vmatpush1.msra.mxu0 0.0
    %82 = vmatprep.subr.mxu0 0.0
    %83 = vmatpush1.msra.mxu0 0.0
    %84 = vmatprep.subr.mxu0 0.0
    %85 = vmatpush1.msra.mxu0 0.0
    %86 = vmatprep.subr.mxu0 0.0
    %87 = vmatpush1.msra.mxu0 0.0
    %88 = vmatprep.subr.mxu0 0.0
    %89 = vmatpush1.msra.mxu0 0.0
    %90 = vmatprep.subr.mxu0 0.0
    %91 = vmatpush1.msra.mxu0 0.0
    %92 = vmatprep.subr.mxu0 0.0
    %93 = vmatpush1.msra.mxu0 0.0
    %94 = vmatprep.subr.mxu0 0.0
    %95 = vmatpush1.msra.mxu0 0.0
    %96 = vmatprep.subr.mxu0 0.0
    %97 = vmatpush1.msra.mxu0 0.0
    %98 = vmatprep.subr.mxu0 0.0
    %99 = vmatpush1.msra.mxu0 0.0
    %100 = vmatprep.subr.mxu0 0.0
    %101 = vmatpush1.msra.mxu0 0.0
    %102 = vmatprep.subr.mxu0 0.0
    %103 = vmatpush1.msra.mxu0 0.0
    %104 = vmatprep.subr.mxu0 0.0
    %105 = vmatpush1.msra.mxu0 0.0
    %106 = vmatprep.subr.mxu0 0.0
    %107 = vmatpush1.msra.mxu0 0.0
    %108 = vmatprep.subr.mxu0 0.0
    %109 = vmatpush1.msra.mxu0 0.0
    %110 = vmatprep.subr.mxu0 0.0
    %111 = vmatpush1.msra.mxu0 0.0
    %112 = vmatprep.subr.mxu0 0.0
    %113 = vmatpush1.msra.mxu0 0.0
    %114 = vmatprep.subr.mxu0 0.0
    %115 = vmatpush1.msra.mxu0 0.0
    %116 = vmatprep.subr.mxu0 0.0
    %117 = vmatpush1.msra.mxu0 0.0
    %118 = vmatprep.subr.mxu0 0.0
    %119 = vmatpush1.msra.mxu0 0.0
    %120 = vmatprep.mubr.f32.mxu0 0.0
    %121 = vmatmul.mubr.f32.gmra.mrb[0].mxu0 %v54
    %v122 = vpop.f32.mrb[0].mxu0
    %v123 = vadd.f32 %v48, %v122
    %v124 = vpop.f32.mrb[0].mxu0
    %125 = vdwg.mxu0
    %v126 = vmax.f32 %v123, 0.0
    %vm127 = vcmask 261120
    %v129 = vsel %vm127, %v126, 0
    %131 = vmatprep.subr.mxu0 0.0
    %132 = vmatpush1.msra.mxu0 %v44
    %133 = vmatprep.subr.mxu0 0.0
    %134 = vmatpush1.msra.mxu0 %v45
    %135 = vmatprep.subr.mxu0 0.0
    %136 = vmatpush1.msra.mxu0 %v46
    %137 = vmatprep.subr.mxu0 0.0
    %138 = vmatpush1.msra.mxu0 %v47
    %139 = vmatprep.subr.mxu0 0.0
    %140 = vmatpush1.msra.mxu0 0.0
    %141 = vmatprep.subr.mxu0 0.0
    %142 = vmatpush1.msra.mxu0 0.0
    %143 = vmatprep.subr.mxu0 0.0
    %144 = vmatpush1.msra.mxu0 0.0
    %145 = vmatprep.subr.mxu0 0.0
    %146 = vmatpush1.msra.mxu0 0.0
    %147 = vmatprep.subr.mxu0 0.0
    %148 = vmatpush1.msra.mxu0 0.0
    %149 = vmatprep.subr.mxu0 0.0
    %150 = vmatpush1.msra.mxu0 0.0
    %151 = vmatprep.subr.mxu0 0.0
    %152 = vmatpush1.msra.mxu0 0.0
    %153 = vmatprep.subr.mxu0 0.0
    %154 = vmatpush1.msra.mxu0 0.0
    %155 = vmatprep.subr.mxu0 0.0
    %156 = vmatpush1.msra.mxu0 0.0
    %157 = vmatprep.subr.mxu0 0.0
    %158 = vmatpush1.msra.mxu0 0.0
    %159 = vmatprep.subr.mxu0 0.0
    %160 = vmatpush1.msra.mxu0 0.0
    %161 = vmatprep.subr.mxu0 0.0
    %162 = vmatpush1.msra.mxu0 0.0
    %163 = vmatprep.subr.mxu0 0.0
    %164 = vmatpush1.msra.mxu0 0.0
    %165 = vmatprep.subr.mxu0 0.0
    %166 = vmatpush1.msra.mxu0 0.0
    %167 = vmatprep.subr.mxu0 0.0
    %168 = vmatpush1.msra.mxu0 0.0
    %169 = vmatprep.subr.mxu0 0.0
    %170 = vmatpush1.msra.mxu0 0.0
    %171 = vmatprep.subr.mxu0 0.0
    %172 = vmatpush1.msra.mxu0 0.0
    %173 = vmatprep.subr.mxu0 0.0
    %174 = vmatpush1.msra.mxu0 0.0
    %175 = vmatprep.subr.mxu0 0.0
    %176 = vmatpush1.msra.mxu0 0.0
    %177 = vmatprep.subr.mxu0 0.0
    %178 = vmatpush1.msra.mxu0 0.0
    %179 = vmatprep.subr.mxu0 0.0
    %180 = vmatpush1.msra.mxu0 0.0
    %181 = vmatprep.subr.mxu0 0.0
    %182 = vmatpush1.msra.mxu0 0.0
    %183 = vmatprep.subr.mxu0 0.0
    %184 = vmatpush1.msra.mxu0 0.0
    %185 = vmatprep.subr.mxu0 0.0
    %186 = vmatpush1.msra.mxu0 0.0
    %187 = vmatprep.subr.mxu0 0.0
    %188 = vmatpush1.msra.mxu0 0.0
    %189 = vmatprep.subr.mxu0 0.0
    %190 = vmatpush1.msra.mxu0 0.0
    %191 = vmatprep.subr.mxu0 0.0
    %192 = vmatpush1.msra.mxu0 0.0
    %193 = vmatprep.subr.mxu0 0.0
    %194 = vmatpush1.msra.mxu0 0.0
    %195 = vmatprep.mubr.f32.mxu0 0.0
    %196 = vmatmul.mubr.f32.gmra.mrb[0].mxu0 %v129
    %v197 = vpop.f32.mrb[0].mxu0
    %v198 = vadd.f32 %v49, %v197
    %v199 = vpop.f32.mrb[0].mxu0
    %200 = vdwg.mxu0
    %v201 = vmax.f32 %v198, 0.0
    %v202 = vmul.f32 %v201, %v50
    %vm203 = vcmask 253952
    %v204 = vsel %vm203, %v202, 0.0
    %205 = vadd.xlane.f32.xlu0 %v204
    %v206 = vpop.xlane.xlu0 %205
    %v207 = vadd.f32 %v206, %v51
    %209 = vrot.lane.b32.xlu0 %v202, 96
    %v210 = vpop.permute.xlu0 %209
    %v212 = vsel %vm203, %v210, 0.0
    %213 = vadd.xlane.f32.xlu0 %v212
    %v214 = vpop.xlane.xlu0 %213
    %v215 = vadd.f32 %v214, %v51
    %217 = vrot.lane.b32.xlu0 %v207, 1
    %v218 = vpop.permute.xlu0 %217
    %v220 = vsub.f32 %v215, %v218
    %v221 = vld [vmem:[%s1] sm:$0x1]
    %223 = vset.pattern.permute.xlu0 1
    %224 = vperm.xlu0 %223, %v220
    %v225 = vpop.permute.xlu0 %224
    %v227 = vmul.f32 %v225, %v221
    %228 = vset.pattern.permute.xlu0 0
    %229 = vperm.xlu0 %228, %v207
    %v230 = vpop.permute.xlu0 %229
    %v232 = vadd.f32 %v230, %v227
    %vm233 = vcmask 57344
    %234 = vst.msk [vmem:[#allocation7] sm:$0x1] %vm233, %v232
    // Predicated region
    $region22: #{tarnet_forward.1} parent=1 // pred_check
      _
    $region23: #{tarnet_forward.1} parent=1 // pred_check_branch
      %236 = sbr.rel (0) target = $region25
    $region24: #{tarnet_forward.1} parent=1 // pred_region
      %s238 = ssub.s32 16, 16
      %239 = vsyncadd [#allocation4], %s238
      %s241 = sshll.u32 [#allocation7], 4
      %s242 = int_to_ptr.vmem [resolvable:$true] %s241
      %244 = dma.vmem_to_hbm [thread:$0]  %s242, 16, %s3, [#allocation4]
    $region25: #{tarnet_forward.1} parent=1 // pred_fallthru
      _
    // Predicated region
    $region26: #{tarnet_forward.1} parent=1 // pred_check
      _
    $region27: #{tarnet_forward.1} parent=1 // pred_check_branch
      %246 = sbr.rel (0) target = $region29
    $region28: #{tarnet_forward.1} parent=1 // pred_region
      %247 = dma.done [#allocation4], 16
    $region29: #{tarnet_forward.1} parent=1 // pred_fallthru
      _
    %248 = vsyncpa [#allocation3], 1
    %249 = vsyncpa [#allocation6], 1
    %250 = vsyncpa [#allocation4], 1

</llo_original>
